<compile_context>
chip_gen: v7x
topology: tpu7x:2x2x1
jax: 0.10.0
libtpu: 0.0.40
codegen_flags: <defaults>
</compile_context>

<pallas_src>
import jax
import jax.numpy as jnp
from jax.experimental import pallas as pl
from jax.experimental.pallas import tpu as pltpu


def conjunction_kernel(x_ref, w_ref, o_ref):
    # Softmax over the feature axis of the (1, D) weight row (f32, max-subtracted).
    w = w_ref[...].astype(jnp.float32)                            # (1, D)
    m = jnp.max(w, axis=1, keepdims=True)
    e = jnp.exp(w - m)
    p = e * pl.reciprocal(jnp.sum(e, axis=1, keepdims=True))      # exact reciprocal

    # Weighted row-sum on VPU (multiply) + XLU (lane reduce); ReLU on VPU.
    x = x_ref[...].astype(jnp.float32)                            # (TB, D)
    y = jnp.sum(x * p, axis=1, keepdims=True)                     # (TB, 1)
    o_ref[...] = jnp.maximum(y, 0.0).astype(o_ref.dtype)


def _round_up(n, m):
    return (n + m - 1) // m * m


def _choose_batch_tile(batch, in_size, itemsize, x_buf_budget_bytes=8 * 1024 * 1024):
    """Largest batch tile whose double-buffered x window fits the VMEM budget."""
    tb = 512  # >=512-row tiles reach ~85% of the HBM roofline for mem-bound kernels
    while tb > 8 and 2 * tb * in_size * itemsize > x_buf_budget_bytes:
        tb //= 2
    # No need for a tile larger than the (sublane-rounded) batch itself.
    return max(8, min(tb, _round_up(batch, 8)))


def conjunction_layer(x, weights, *, batch_tile=None,
                      vmem_limit_bytes=32 * 1024 * 1024):
    """x: (B, D), weights: (1, D) -> (B, 1). ReLU(x @ softmax(weights).T)."""
    B, D = x.shape
    assert weights.shape == (1, D)

    tb = batch_tile or _choose_batch_tile(B, D, x.dtype.itemsize)
    grid = (pl.cdiv(B, tb),)  # ragged last block: OOB reads are row-local garbage
    #                           feeding rows whose stores Pallas drops -> safe.

    cost = pl.CostEstimate(
        flops=int(2 * B * D),
        transcendentals=int(D * grid[0]),          # per-tile softmax exp
        bytes_accessed=int(x.size * x.dtype.itemsize
                           + weights.size * weights.dtype.itemsize
                           + B * jnp.dtype(x.dtype).itemsize),
    )

    return pl.pallas_call(
        conjunction_kernel,
        out_shape=jax.ShapeDtypeStruct((B, 1), x.dtype),
        grid=grid,
        in_specs=[
            pl.BlockSpec((tb, D), lambda i: (i, 0)),   # x: streamed over batch
            pl.BlockSpec((1, D), lambda i: (0, 0)),    # weights: resident block
        ],
        out_specs=pl.BlockSpec((tb, 1), lambda i: (i, 0)),
        compiler_params=pltpu.CompilerParams(
            dimension_semantics=("parallel",),         # shard batch across TCs (v7x)
            vmem_limit_bytes=vmem_limit_bytes,         # > v5e's 16 MiB scoped default
        ),
        cost_estimate=cost,
    )(x, weights)


def conjunction_layer_ref(x, weights):
    p = jax.nn.softmax(weights.astype(jnp.float32), axis=1)
    return jnp.maximum(x.astype(jnp.float32) @ p.T, 0.0).astype(x.dtype)


if __name__ == "__main__":
    key = jax.random.PRNGKey(0)
    k_w, k_x, k_w2, k_x2 = jax.random.split(key, 4)

    # Small case matching the module's toy usage (single tile, grid of 1).
    batch, in_size = 8, 32
    weights = 0.5 + 0.1 * jax.random.normal(k_w, (1, in_size), dtype=jnp.float32)
    x = jax.random.normal(k_x, (batch, in_size), dtype=jnp.float32)

    out = jax.block_until_ready(conjunction_layer(x, weights))
    ref = conjunction_layer_ref(x, weights)
    assert out.shape == (batch, 1)
    assert jnp.allclose(out, ref, atol=1e-5, rtol=1e-5)

    # Multi-tile + ragged-batch check to exercise the pipelined grid path.
    batch2, in_size2 = 1037, 96
    weights2 = 0.5 + 0.1 * jax.random.normal(k_w2, (1, in_size2), dtype=jnp.float32)
    x2 = jax.random.normal(k_x2, (batch2, in_size2), dtype=jnp.float32)

    out2 = jax.block_until_ready(conjunction_layer(x2, weights2))
    ref2 = conjunction_layer_ref(x2, weights2)
    assert out2.shape == (batch2, 1)
    assert jnp.allclose(out2, ref2, atol=1e-5, rtol=1e-5)

    print("KERNEL_OK")
</pallas_src>

<mosaic_0001>
module attributes {stable_mosaic.version = 11 : i64} {
  func.func @conjunction_kernel(%arg0: i32, %arg1: memref<8x32xf32, #tpu.memory_space<vmem>>, %arg2: memref<1x32xf32, #tpu.memory_space<vmem>>, %arg3: memref<8x1xf32, #tpu.memory_space<vmem>>) attributes {dimension_semantics = [#tpu.dimension_semantics<parallel>], iteration_bounds = array<i64: 1>, scalar_prefetch = 0 : i64, scratch_operands = 0 : i64, tpu.core_type = #tpu.core_type<tc>, window_params = [{transform_indices = @transform_0, window_bounds = array<i64: 8, 32>}, {pipeline_mode = #tpu.pipeline_mode<synchronous>, transform_indices = @transform_1, window_bounds = array<i64: 1, 32>}, {transform_indices = @transform_2, window_bounds = array<i64: 8, 1>}]} {
    %c0 = arith.constant 0 : index
    %c0_0 = arith.constant 0 : index
    %0 = vector.load %arg2[%c0, %c0_0] : memref<1x32xf32, #tpu.memory_space<vmem>>, vector<1x32xf32>
    %cst = arith.constant dense<0xFF800000> : vector<1xf32>
    %1 = vector.multi_reduction <maximumf>, %0, %cst [1] : vector<1x32xf32> to vector<1xf32>
    %2 = vector.shape_cast %1 : vector<1xf32> to vector<1x1xf32>
    %3 = vector.broadcast %2 : vector<1x1xf32> to vector<1x32xf32>
    %4 = arith.subf %0, %3 : vector<1x32xf32>
    %5 = math.exp %4 : vector<1x32xf32>
    %cst_1 = arith.constant dense<0.000000e+00> : vector<1xf32>
    %6 = vector.multi_reduction <add>, %5, %cst_1 [1] : vector<1x32xf32> to vector<1xf32>
    %7 = vector.shape_cast %6 : vector<1xf32> to vector<1x1xf32>
    %8 = tpu.reciprocal %7 : vector<1x1xf32> -> vector<1x1xf32>
    %9 = vector.broadcast %8 : vector<1x1xf32> to vector<1x32xf32>
    %10 = arith.mulf %5, %9 : vector<1x32xf32>
    %c0_2 = arith.constant 0 : index
    %c0_3 = arith.constant 0 : index
    %11 = vector.load %arg1[%c0_2, %c0_3] : memref<8x32xf32, #tpu.memory_space<vmem>>, vector<8x32xf32>
    %12 = vector.broadcast %10 : vector<1x32xf32> to vector<8x32xf32>
    %13 = arith.mulf %11, %12 : vector<8x32xf32>
    %cst_4 = arith.constant dense<0.000000e+00> : vector<8xf32>
    %14 = vector.multi_reduction <add>, %13, %cst_4 [1] : vector<8x32xf32> to vector<8xf32>
    %15 = vector.shape_cast %14 : vector<8xf32> to vector<8x1xf32>
    %cst_5 = arith.constant 0.000000e+00 : f32
    %16 = vector.broadcast %cst_5 : f32 to vector<8x1xf32>
    %17 = arith.maximumf %15, %16 : vector<8x1xf32>
    %c0_6 = arith.constant 0 : index
    %c0_7 = arith.constant 0 : index
    %18 = vector.load %arg3[%c0_6, %c0_7] : memref<8x1xf32, #tpu.memory_space<vmem>>, vector<8x1xf32>
    tpu.vector_store %arg3[%c0_6, %c0_7], %17 {strides = array<i32>} : memref<8x1xf32, #tpu.memory_space<vmem>>, vector<8x1xf32>,
    return
  }
  func.func @transform_0(%arg0: i32) -> (i32, i32) {
    %c0_i32 = arith.constant 0 : i32
    %c0_i32_0 = arith.constant 0 : i32
    return %arg0, %c0_i32 : i32, i32
  }
  func.func @transform_1(%arg0: i32) -> (i32, i32) {
    %c0_i32 = arith.constant 0 : i32
    %c0_i32_0 = arith.constant 0 : i32
    %c0_i32_1 = arith.constant 0 : i32
    return %c0_i32, %c0_i32_0 : i32, i32
  }
  func.func @transform_2(%arg0: i32) -> (i32, i32) {
    %c0_i32 = arith.constant 0 : i32
    %c0_i32_0 = arith.constant 0 : i32
    return %arg0, %c0_i32 : i32, i32
  }
}

</mosaic_0001>

<llo_original>
// kernel: tpu_custom_call.1
$region0: #{tpu_custom_call.1}
  #allocation0 [shape = 'u32[]', space=smem, size = 0x4, offset = 0x4, fixed_abs, tag = 'smem constant byte address 0x4 - core index']
  #allocation1 [shape = 'u32[144,128]{1,0:T(1,128)}', space=vmem, size = 0x12000, scoped, tag = 'internal scratch']
  %s0 = inlined_call_operand.hbm [shape: f32[8,32], index: 0, kind: input, shape index: {}]
  %s1 = inlined_call_operand.vmem [shape: f32[1,32], index: 1, kind: input, shape index: {}]
  %s2 = inlined_call_operand.vmem [shape: f32[8,1], index: 2, kind: output, shape index: {}]
  %s3 = sld [smem:[#allocation0]]
  $region22: #{tpu_custom_call.1} parent=0
    _
  %s5 = ssub.s32 1, %s3
  %s6 = scalar_select 0, %s5, %s3
  $region1: #{tpu_custom_call.1} parent=0
    #allocation2 [shape = 'u8[4096]{0}', space=vmem, size = 0x1000, scoped, tag = 'input window, operand 0, single buffered']
    #allocation3 [shape = 's32[1]{0}', space=sflag, size = 0x4, scoped, tag = 'scoped memory for tpu_custom_call.1']
    %7 = vsyncpa [#allocation3], 0
    // Predicated region
    $region2: #{tpu_custom_call.1} parent=1 // pred_check
      _
    $region3: #{tpu_custom_call.1} parent=1 // pred_check_branch
      %9 = sbr.rel (0) target = $region5
    $region4: #{tpu_custom_call.1} parent=1 // pred_region
      %s11 = ssub.s32 128, 128
      %12 = vsyncadd [#allocation3], %s11
      %s14 = sshll.u32 [#allocation2], 4
      %s15 = int_to_ptr.vmem [resolvable:$true] %s14
      %17 = dma.hbm_to_vmem [thread:$0]  %s0, 128, %s15, [#allocation3]
    $region5: #{tpu_custom_call.1} parent=1 // pred_fallthru
      _
    // Predicated region
    $region6: #{tpu_custom_call.1} parent=1 // pred_check
      _
    $region7: #{tpu_custom_call.1} parent=1 // pred_check_branch
      %19 = sbr.rel (0) target = $region9
    $region8: #{tpu_custom_call.1} parent=1 // pred_region
      _
    $region9: #{tpu_custom_call.1} parent=1 // pred_fallthru
      _
    // Predicated region
    $region10: #{tpu_custom_call.1} parent=1 // pred_check
      _
    $region11: #{tpu_custom_call.1} parent=1 // pred_check_branch
      %21 = sbr.rel (0) target = $region13
    $region12: #{tpu_custom_call.1} parent=1 // pred_region
      %22 = dma.done [#allocation3], 128
    $region13: #{tpu_custom_call.1} parent=1 // pred_fallthru
      _
    %v23 = vld [vmem:[%s1] sm:$0x1]
    %vm24 = vcmask 253952
    %v25 = vsel %vm24, %v23, -inf
    %26 = vmax.xlane.f32.xlu0 %v25
    %v27 = vpop.xlane.xlu0 %26
    %v28 = vsub.f32 %v23, %v27
    %v29 = vmul.f32 %v28, 1.442695
    %v30 = vpow.pop %v29
    %v31 = vsel %vm24, %v30, 0.0
    %32 = vadd.xlane.f32.xlu0 %v31
    %v33 = vpop.xlane.xlu0 %32
    %v34 = vrcp.pop %v33
    %v35 = vmul.f32 %v30, %v34
    %v36 = vld [vmem:[#allocation2] sm:$0xff]
    %v38 = vlaneseq
    %v39 = vshrl.u32 %v38, 7
    %v40 = vsub.s32 0, %v39
    %v41 = vrot.slane %v35, %v40
    %v43 = vmul.f32 %v36, %v41
    %vm44 = vcmask 261120
    %v45 = vsel %vm44, %v43, 0.0
    %46 = vadd.xlane.f32.xlu0 %v45
    %v47 = vpop.xlane.xlu0 %46
    %v48 = vmax.f32 %v47, 0.0
    %vm49 = vcmask 7168
    %50 = vst.msk [vmem:[%s2] sm:$0xff] %vm49, %v48
    // Predicated region
    $region14: #{tpu_custom_call.1} parent=1 // pred_check
      _
    $region15: #{tpu_custom_call.1} parent=1 // pred_check_branch
      %52 = sbr.rel (0) target = $region17
    $region16: #{tpu_custom_call.1} parent=1 // pred_region
      _
    $region17: #{tpu_custom_call.1} parent=1 // pred_fallthru
      _
    // Predicated region
    $region18: #{tpu_custom_call.1} parent=1 // pred_check
      _
    $region19: #{tpu_custom_call.1} parent=1 // pred_check_branch
      %54 = sbr.rel (0) target = $region21
    $region20: #{tpu_custom_call.1} parent=1 // pred_region
      _
    $region21: #{tpu_custom_call.1} parent=1 // pred_fallthru
      _
    %55 = vsyncpa [#allocation3], 1

</llo_original>
